<compile_context>
chip_gen: v7x
topology: tpu7x:2x2x1
jax: 0.10.0
libtpu: 0.0.40
codegen_flags: <defaults>
</compile_context>

<pallas_src>
import jax
import jax.numpy as jnp
from jax.experimental import pallas as pl
from jax.experimental.pallas import tpu as pltpu


def _round_up(x, m):
    return ((x + m - 1) // m) * m


# ---------------------------------------------------------------------------
# Path 1: small N==1 linear (the actual module). Single block, pure VPU/XLU.
# ---------------------------------------------------------------------------
def _small_n1_kernel(x_ref, w_ref, b_ref, o_ref):
    # x: (B, K), w: (1, K) [PyTorch (out, in) row], b: (1, 1), o: (B, 1).
    # Broadcast multiply (VPU) + lane reduction (XLU) + bias; no MXU, no padding.
    prod = x_ref[...].astype(jnp.float32) * w_ref[...].astype(jnp.float32)
    o_ref[...] = jnp.sum(prod, axis=-1, keepdims=True) + b_ref[...]


def _linear_small_n1(x, weight, bias):
    B, K = x.shape
    b2d = bias.reshape(1, 1).astype(jnp.float32)
    # No grid / no BlockSpecs: whole arrays become single VMEM blocks.
    return pl.pallas_call(
        _small_n1_kernel,
        out_shape=jax.ShapeDtypeStruct((B, 1), jnp.float32),
        cost_estimate=pl.CostEstimate(
            flops=2 * B * K,
            bytes_accessed=4 * (B * K + K + B),
            transcendentals=0,
        ),
    )(x, weight, b2d)


# ---------------------------------------------------------------------------
# Path 2: tiled MXU linear for real sizes.
# ---------------------------------------------------------------------------
def _tiled_kernel(x_ref, wt_ref, b_ref, o_ref):
    # x_ref: (tm, tk), wt_ref: (tk, tn) [pre-transposed weight], b_ref: (1, tn),
    # o_ref: (tm, tn) f32.  The output block index (i, j) is invariant across
    # the innermost K grid axis, so o_ref stays resident in VMEM: initialize it
    # with the bias on the first K step and accumulate MXU partial products
    # directly into it (no scratch accumulator, no epilogue copy).
    # NOTE: this relies on K being the LAST ("arbitrary") grid axis.
    k = pl.program_id(2)

    @pl.when(k == 0)
    def _():
        o_ref[...] = jnp.broadcast_to(b_ref[...], o_ref.shape)

    o_ref[...] += jnp.dot(
        x_ref[...], wt_ref[...], preferred_element_type=jnp.float32
    )


def _linear_tiled(x, weight, bias, *, tm=256, tn=256, tk=512):
    B, K = x.shape
    N, Kw = weight.shape
    assert Kw == K
    out_dtype = jnp.float32  # module is f32; also lets us accumulate in o_ref

    # Pre-transpose the stationary weight once (MXU-native (K, N) layout;
    # guarantees no per-tile XLU transpose inside the kernel).
    wt = weight.T  # (K, N)

    # Clamp tiles to the problem; pad only if a dim does not divide its tile.
    tm = min(tm, _round_up(B, 8))
    tn = min(tn, _round_up(N, 128))
    tk = min(tk, _round_up(K, 128))
    Mp = _round_up(B, tm)
    Kp = _round_up(K, tk)
    Np = _round_up(N, tn)

    if (Mp, Kp) != (B, K):
        x = jnp.zeros((Mp, Kp), x.dtype).at[:B, :K].set(x)
    if (Kp, Np) != (K, N):
        wt = jnp.zeros((Kp, Np), wt.dtype).at[:K, :N].set(wt)
    b2d = bias.reshape(1, N).astype(out_dtype)
    if Np != N:
        b2d = jnp.zeros((1, Np), out_dtype).at[:, :N].set(b2d)

    grid = (Mp // tm, Np // tn, Kp // tk)  # K last: output tile carried over k.

    out = pl.pallas_call(
        _tiled_kernel,
        out_shape=jax.ShapeDtypeStruct((Mp, Np), out_dtype),
        grid=grid,
        in_specs=[
            pl.BlockSpec((tm, tk), lambda i, j, k: (i, k)),   # x tile
            pl.BlockSpec((tk, tn), lambda i, j, k: (k, j)),   # W^T tile
            pl.BlockSpec((1, tn), lambda i, j, k: (0, j)),    # bias tile
        ],
        out_specs=pl.BlockSpec((tm, tn), lambda i, j, k: (i, j)),
        compiler_params=pltpu.CompilerParams(
            dimension_semantics=("parallel", "parallel", "arbitrary"),
        ),
        cost_estimate=pl.CostEstimate(
            flops=2 * Mp * Np * Kp,
            bytes_accessed=4 * (Mp * Kp + Kp * Np + Mp * Np),
            transcendentals=0,
        ),
    )(x, wt, b2d)

    if (Mp, Np) != (B, N):
        out = out[:B, :N]
    return out


def linear_forward(x, weight, bias, *, tm=256, tn=256, tk=512):
    """y = x @ weight.T + bias, weight in PyTorch (out_features, in_features) layout."""
    B, K = x.shape
    N, Kw = weight.shape
    assert Kw == K
    # Shipped module (output_size=1) and whole problem trivially fits in VMEM:
    # take the single-block VPU path (no MXU, no padding, no launch overhead
    # beyond one pallas_call).
    if N == 1 and (B * K + K + B) * 4 <= 4 * 1024 * 1024:
        return _linear_small_n1(x, weight, bias)
    return _linear_tiled(x, weight, bias, tm=tm, tn=tn, tk=tk)


def init_params(key, input_size=9, output_size=1):
    # Xavier (Glorot) uniform init, matching nn.init.xavier_uniform_; zero bias.
    bound = jnp.sqrt(6.0 / (input_size + output_size))
    weight = jax.random.uniform(
        key, (output_size, input_size), dtype=jnp.float32,
        minval=-bound, maxval=bound,
    )
    bias = jnp.zeros((output_size,), dtype=jnp.float32)
    return weight, bias


if __name__ == "__main__":
    key = jax.random.PRNGKey(0)
    k_w, k_x, k_w2, k_b2, k_x2 = jax.random.split(key, 5)

    # --- Shipped module shape: nn.Linear(9, 1), batch of 8 (small VPU path). ---
    input_size, output_size, batch = 9, 1, 8
    weight, bias = init_params(k_w, input_size, output_size)
    x = jax.random.normal(k_x, (batch, input_size), dtype=jnp.float32)

    y = jax.block_until_ready(linear_forward(x, weight, bias))
    y_ref = x @ weight.T + bias[None, :]
    assert y.shape == (batch, output_size), y.shape
    assert jnp.allclose(y, y_ref, atol=1e-5, rtol=1e-5), "small-path mismatch"

    # --- Sanity check of the tiled MXU path at a modest multi-tile size. ---
    M2, K2, N2 = 256, 1024, 256
    w2 = jax.random.normal(k_w2, (N2, K2), dtype=jnp.float32)
    b2 = jax.random.normal(k_b2, (N2,), dtype=jnp.float32)
    x2 = jax.random.normal(k_x2, (M2, K2), dtype=jnp.float32)

    y2 = jax.block_until_ready(linear_forward(x2, w2, b2, tm=128, tn=128, tk=256))
    y2_ref = x2 @ w2.T + b2[None, :]
    assert y2.shape == (M2, N2), y2.shape
    assert jnp.allclose(y2, y2_ref, atol=1e-3, rtol=1e-4), "tiled-path mismatch"

    print("KERNEL_OK")
</pallas_src>

<mosaic_0001>
module attributes {stable_mosaic.version = 11 : i64} {
  func.func @_small_n1_kernel(%arg0: memref<8x9xf32, #tpu.memory_space<vmem>>, %arg1: memref<1x9xf32, #tpu.memory_space<vmem>>, %arg2: memref<1x1xf32, #tpu.memory_space<vmem>>, %arg3: memref<8x1xf32, #tpu.memory_space<vmem>>) attributes {dimension_semantics = [], scalar_prefetch = 0 : i64, scratch_operands = 0 : i64, tpu.core_type = #tpu.core_type<tc>} {
    %c0 = arith.constant 0 : index
    %c0_0 = arith.constant 0 : index
    %0 = vector.load %arg0[%c0, %c0_0] : memref<8x9xf32, #tpu.memory_space<vmem>>, vector<8x9xf32>
    %c0_1 = arith.constant 0 : index
    %c0_2 = arith.constant 0 : index
    %1 = vector.load %arg1[%c0_1, %c0_2] : memref<1x9xf32, #tpu.memory_space<vmem>>, vector<1x9xf32>
    %2 = vector.broadcast %1 : vector<1x9xf32> to vector<8x9xf32>
    %3 = arith.mulf %0, %2 : vector<8x9xf32>
    %cst = arith.constant dense<0.000000e+00> : vector<8xf32>
    %4 = vector.multi_reduction <add>, %3, %cst [1] : vector<8x9xf32> to vector<8xf32>
    %5 = vector.shape_cast %4 : vector<8xf32> to vector<8x1xf32>
    %c0_3 = arith.constant 0 : index
    %c0_4 = arith.constant 0 : index
    %6 = vector.load %arg2[%c0_3, %c0_4] : memref<1x1xf32, #tpu.memory_space<vmem>>, vector<1x1xf32>
    %7 = vector.broadcast %6 : vector<1x1xf32> to vector<8x1xf32>
    %8 = arith.addf %5, %7 : vector<8x1xf32>
    %c0_5 = arith.constant 0 : index
    %c0_6 = arith.constant 0 : index
    %9 = vector.load %arg3[%c0_5, %c0_6] : memref<8x1xf32, #tpu.memory_space<vmem>>, vector<8x1xf32>
    tpu.vector_store %arg3[%c0_5, %c0_6], %8 {strides = array<i32>} : memref<8x1xf32, #tpu.memory_space<vmem>>, vector<8x1xf32>,
    return
  }
}

</mosaic_0001>

<llo_original>
// kernel: tpu_custom_call.1
$region0: #{tpu_custom_call.1}
  #allocation0 [shape = 'u32[]', space=smem, size = 0x4, offset = 0x4, fixed_abs, tag = 'smem constant byte address 0x4 - core index']
  #allocation1 [shape = 'u32[144,128]{1,0:T(1,128)}', space=vmem, size = 0x12000, scoped, tag = 'internal scratch']
  #allocation2 [shape = 'f32[1,1]{1,0:T(1,128)S(1)}', space=vmem, size = 0x200, scoped, tag = 'scoped memory for tpu_custom_call.1']
  %s0 = inlined_call_operand.hbm [shape: f32[8,9], index: 0, kind: input, shape index: {}]
  %s1 = inlined_call_operand.vmem [shape: f32[1,9], index: 1, kind: input, shape index: {}]
  %s2 = inlined_call_operand.<no memory space> [shape: f32[1,1], index: 2, kind: input, shape index: {}]
  %s3 = inlined_call_operand.vmem [shape: f32[8,1], index: 3, kind: output, shape index: {}]
  %s4 = sld [smem:[#allocation0]]
  $region26: #{tpu_custom_call.1} parent=0
    _
  %s6 = ssub.s32 1, %s4
  %s7 = scalar_select 0, %s6, %s4
  %v8 = vstv %s2
  %9 = vst [vmem:[#allocation2] sm:$0x1] %v8
  $region1: #{tpu_custom_call.1} parent=0
    #allocation3 [shape = 'u8[4096]{0}', space=vmem, size = 0x1000, scoped, tag = 'input window, operand 0, single buffered']
    #allocation4 [shape = 's32[1]{0}', space=sflag, size = 0x4, scoped, tag = 'scoped memory for tpu_custom_call.1']
    %10 = vsyncpa [#allocation4], 0
    // Predicated region
    $region2: #{tpu_custom_call.1} parent=1 // pred_check
      _
    $region3: #{tpu_custom_call.1} parent=1 // pred_check_branch
      %12 = sbr.rel (0) target = $region5
    $region4: #{tpu_custom_call.1} parent=1 // pred_region
      %s14 = ssub.s32 128, 128
      %15 = vsyncadd [#allocation4], %s14
      %s17 = sshll.u32 [#allocation3], 4
      %s18 = int_to_ptr.vmem [resolvable:$true] %s17
      %20 = dma.hbm_to_vmem [thread:$0]  %s0, 128, %s18, [#allocation4]
    $region5: #{tpu_custom_call.1} parent=1 // pred_fallthru
      _
    // Predicated region
    $region6: #{tpu_custom_call.1} parent=1 // pred_check
      _
    $region7: #{tpu_custom_call.1} parent=1 // pred_check_branch
      %22 = sbr.rel (0) target = $region9
    $region8: #{tpu_custom_call.1} parent=1 // pred_region
      _
    $region9: #{tpu_custom_call.1} parent=1 // pred_fallthru
      _
    // Predicated region
    $region10: #{tpu_custom_call.1} parent=1 // pred_check
      _
    $region11: #{tpu_custom_call.1} parent=1 // pred_check_branch
      %24 = sbr.rel (0) target = $region13
    $region12: #{tpu_custom_call.1} parent=1 // pred_region
      _
    $region13: #{tpu_custom_call.1} parent=1 // pred_fallthru
      _
    // Predicated region
    $region14: #{tpu_custom_call.1} parent=1 // pred_check
      _
    $region15: #{tpu_custom_call.1} parent=1 // pred_check_branch
      %26 = sbr.rel (0) target = $region17
    $region16: #{tpu_custom_call.1} parent=1 // pred_region
      %27 = dma.done [#allocation4], 128
    $region17: #{tpu_custom_call.1} parent=1 // pred_fallthru
      _
    %v28 = vld [vmem:[#allocation3] sm:$0xff]
    %v29 = vld [vmem:[%s1] sm:$0x1]
    %v31 = vlaneseq
    %v32 = vshrl.u32 %v31, 7
    %v33 = vsub.s32 0, %v32
    %v34 = vrot.slane %v29, %v33
    %v36 = vmul.f32 %v28, %v34
    %vm37 = vcmask 72704
    %v38 = vsel %vm37, %v36, 0.0
    %39 = vadd.xlane.f32.xlu0 %v38
    %v40 = vpop.xlane.xlu0 %39
    %v41 = vld [vmem:[#allocation2] sm:$0x1]
    %v43 = vlaneseq
    %v44 = vshrl.u32 %v43, 7
    %v45 = vsub.s32 0, %v44
    %v46 = vrot.slane %v41, %v45
    %v48 = vadd.f32 %v40, %v46
    %vm49 = vcmask 7168
    %50 = vst.msk [vmem:[%s3] sm:$0xff] %vm49, %v48
    // Predicated region
    $region18: #{tpu_custom_call.1} parent=1 // pred_check
      _
    $region19: #{tpu_custom_call.1} parent=1 // pred_check_branch
      %52 = sbr.rel (0) target = $region21
    $region20: #{tpu_custom_call.1} parent=1 // pred_region
      _
    $region21: #{tpu_custom_call.1} parent=1 // pred_fallthru
      _
    // Predicated region
    $region22: #{tpu_custom_call.1} parent=1 // pred_check
      _
    $region23: #{tpu_custom_call.1} parent=1 // pred_check_branch
      %54 = sbr.rel (0) target = $region25
    $region24: #{tpu_custom_call.1} parent=1 // pred_region
      _
    $region25: #{tpu_custom_call.1} parent=1 // pred_fallthru
      _
    %55 = vsyncpa [#allocation4], 1

</llo_original>
